<compile_context>
chip_gen: v6e
topology: v6e:2x2x1
jax: 0.10.0
libtpu: 0.0.40
codegen_flags: <defaults>
</compile_context>

<pallas_src>
import math
import numpy as np

import jax
import jax.numpy as jnp
from jax import lax
from jax.experimental import pallas as pl
from jax.experimental.pallas import tpu as pltpu


# --------------------------------------------------------------------------
# Filter coefficients and block-FIR matrices (host side, float64)
# --------------------------------------------------------------------------
def _lowpass_biquad_coeffs(sample_rate, cutoff, Q=0.707):
    w0 = 2.0 * math.pi * cutoff / sample_rate
    alpha = math.sin(w0) / (2.0 * Q)
    b0 = (1.0 - math.cos(w0)) / 2.0
    b1 = 1.0 - math.cos(w0)
    b2 = b0
    a0 = 1.0 + alpha
    a1 = -2.0 * math.cos(w0)
    a2 = 1.0 - alpha
    return (b0 / a0, b1 / a0, b2 / a0, a1 / a0, a2 / a0)


def _block_filter_matrices(b0, b1, b2, a1, a2, K):
    """H^T (Toeplitz impulse response) and the 4 state-carry vectors."""
    def run(x1, x2, y1, y2, impulse):
        ys = np.zeros(K, np.float64)
        for t in range(K):
            xt = 1.0 if (impulse and t == 0) else 0.0
            yt = b0 * xt + b1 * x1 + b2 * x2 - a1 * y1 - a2 * y2
            ys[t] = yt
            x2, x1 = x1, xt
            y2, y1 = y1, yt
        return ys

    h = run(0.0, 0.0, 0.0, 0.0, True)     # impulse response of the biquad
    c1 = run(1.0, 0.0, 0.0, 0.0, False)   # response to x[-1] = 1
    c2 = run(0.0, 1.0, 0.0, 0.0, False)   # response to x[-2] = 1
    d1 = run(0.0, 0.0, 1.0, 0.0, False)   # response to y[-1] = 1
    d2 = run(0.0, 0.0, 0.0, 1.0, False)   # response to y[-2] = 1

    idx = np.arange(K)
    diff = idx[None, :] - idx[:, None]            # [k, t] -> t - k
    ht = np.where(diff >= 0, h[np.clip(diff, 0, K - 1)], 0.0)  # H^T, [K, K]
    carry = np.zeros((8, K), np.float64)          # sublane-pad rows to 8
    carry[0], carry[1], carry[2], carry[3] = c1, c2, d1, d2
    return ht, carry


# --------------------------------------------------------------------------
# Pallas kernel: one (row tile, time block) step of the block-FIR recursion
# --------------------------------------------------------------------------
def _biquad_block_kernel(x_ref, hth_ref, htl_ref, carry_ref, o_ref,
                         x1_ref, x2_ref, y1_ref, y2_ref):
    # x_ref / o_ref : [Rb, K]  rows = independent segments, lanes = time
    # hth_ref/htl_ref: [K, K]  bf16 hi/lo split of H^T
    # carry_ref     : [8, K]   rows 0..3 = responses to x[-1], x[-2], y[-1], y[-2]
    # *_ref scratch : [Rb, 1]  carried filter state (y state stays UNclamped)
    t_blk = pl.program_id(1)

    @pl.when(t_blk == 0)
    def _():  # zero initial conditions for every segment row
        x1_ref[...] = jnp.zeros_like(x1_ref)
        x2_ref[...] = jnp.zeros_like(x2_ref)
        y1_ref[...] = jnp.zeros_like(y1_ref)
        y2_ref[...] = jnp.zeros_like(y2_ref)

    x = x_ref[...]                                        # [Rb, K] f32

    # zero-state response: f32-accurate MXU matmul via explicit bf16 hi/lo split
    x_hi = x.astype(jnp.bfloat16)
    x_lo = (x - x_hi.astype(jnp.float32)).astype(jnp.bfloat16)
    y = jnp.dot(x_hi, hth_ref[...], preferred_element_type=jnp.float32)
    y = y + jnp.dot(x_lo, hth_ref[...], preferred_element_type=jnp.float32)
    y = y + jnp.dot(x_hi, htl_ref[...], preferred_element_type=jnp.float32)

    # carried-state contribution: 4 outer products on the VPU (full f32)
    y = (y
         + x1_ref[...] * carry_ref[0:1, :]
         + x2_ref[...] * carry_ref[1:2, :]
         + y1_ref[...] * carry_ref[2:3, :]
         + y2_ref[...] * carry_ref[3:4, :])

    # update carried state (recursion state stays unclamped, torchaudio-style)
    x1_ref[...] = x[:, -1:]
    x2_ref[...] = x[:, -2:-1]
    y1_ref[...] = y[:, -1:]
    y2_ref[...] = y[:, -2:-1]

    # clamp only the emitted samples
    o_ref[...] = jnp.clip(y, -1.0, 1.0)


# --------------------------------------------------------------------------
# Wrapper
# --------------------------------------------------------------------------
def lf_forward(rec_audio, cut_off_fre=8000, sample_rate=16000,
               segment_num=10, test=None, time_block=256, row_block=256):
    """Pallas TPU forward of the LF module.  rec_audio: [B, L]."""
    rec_audio = rec_audio.astype(jnp.float32)
    B, L = rec_audio.shape

    if not test:
        seg_len = L // segment_num
        # [B, L] -> [B*segment_num, seg_len]; contiguous reshape, NO transpose.
        x = rec_audio[:, :seg_len * segment_num].reshape(B * segment_num, seg_len)
    else:
        seg_len = L
        x = rec_audio
    R, T = x.shape

    # --- tile geometry: time on lanes (x128), rows on sublanes (x8) --------
    K = max(128, (int(time_block) // 128) * 128)   # 256 on v6e/v7x, 128 on v5e
    n_t = -(-T // K)
    T_pad = n_t * K
    r8 = -(-R // 8) * 8
    Rb = min(max(8, (int(row_block) // 8) * 8), r8)
    n_r = -(-r8 // Rb)
    R_pad = n_r * Rb

    x_p = jnp.pad(x, ((0, R_pad - R), (0, T_pad - T)))

    # constant block-FIR matrices (built in float64, split to bf16 hi/lo)
    b0, b1, b2, a1, a2 = _lowpass_biquad_coeffs(sample_rate, cut_off_fre)
    ht, carry = _block_filter_matrices(b0, b1, b2, a1, a2, K)
    ht_f32 = jnp.asarray(ht, jnp.float32)
    ht_hi = ht_f32.astype(jnp.bfloat16)
    ht_lo = (ht_f32 - ht_hi.astype(jnp.float32)).astype(jnp.bfloat16)
    carry_f32 = jnp.asarray(carry, jnp.float32)

    out_p = pl.pallas_call(
        _biquad_block_kernel,
        out_shape=jax.ShapeDtypeStruct((R_pad, T_pad), jnp.float32),
        grid_spec=pltpu.PrefetchScalarGridSpec(
            num_scalar_prefetch=0,
            grid=(n_r, n_t),                               # rows, time blocks
            in_specs=[
                pl.BlockSpec((Rb, K), lambda r, t: (r, t)),   # x
                pl.BlockSpec((K, K), lambda r, t: (0, 0)),    # H^T (hi)
                pl.BlockSpec((K, K), lambda r, t: (0, 0)),    # H^T (lo)
                pl.BlockSpec((8, K), lambda r, t: (0, 0)),    # carry vectors
            ],
            out_specs=pl.BlockSpec((Rb, K), lambda r, t: (r, t)),
            scratch_shapes=[pltpu.VMEM((Rb, 1), jnp.float32)] * 4,
        ),
        compiler_params=pltpu.CompilerParams(
            dimension_semantics=("parallel", "arbitrary")),
    )(x_p, ht_hi, ht_lo, carry_f32)

    out = out_p[:R, :T]
    if not test:
        out = out.reshape(B, segment_num * seg_len)
    return out


# --------------------------------------------------------------------------
# Pure-JAX reference (sequential scan) for correctness checking
# --------------------------------------------------------------------------
def _lf_forward_ref(rec_audio, cut_off_fre=8000, sample_rate=16000,
                    segment_num=10, test=None):
    rec_audio = rec_audio.astype(jnp.float32)
    B, L = rec_audio.shape
    b0, b1, b2, a1, a2 = (jnp.float32(c) for c in
                          _lowpass_biquad_coeffs(sample_rate, cut_off_fre))
    if not test:
        seg_len = L // segment_num
        x = rec_audio[:, :seg_len * segment_num].reshape(B * segment_num, seg_len)
    else:
        seg_len = L
        x = rec_audio

    def step(carry, xt):
        x1, x2, y1, y2 = carry
        yt = b0 * xt + b1 * x1 + b2 * x2 - a1 * y1 - a2 * y2
        return (xt, x1, yt, y1), jnp.clip(yt, -1.0, 1.0)

    z = jnp.zeros((x.shape[0],), jnp.float32)
    _, ys = lax.scan(step, (z, z, z, z), x.T)     # scan over time
    out = ys.T
    if not test:
        out = out.reshape(B, segment_num * seg_len)
    return out


if __name__ == "__main__":
    key = jax.random.PRNGKey(0)
    k1, k2, k3 = jax.random.split(key, 3)

    # Test 1: module defaults (cutoff = 8000 Hz = Nyquist).  This filter is
    # marginally stable (double pole at z=-1), so any two correct f32
    # implementations drift apart ~ eps * T^1.5; keep segments short and the
    # tolerance correspondingly looser.
    B, L = 2, 645                       # 10 segments of 64, 5 trailing dropped
    audio = jax.random.uniform(k1, (B, L), jnp.float32, minval=-1.0, maxval=1.0)
    out = lf_forward(audio)
    jax.block_until_ready(out)
    assert out.shape == (B, 640), out.shape
    ref = _lf_forward_ref(audio)
    err = float(jnp.max(jnp.abs(out - ref)))
    assert err < 5e-3, err

    # Test 2: stable cutoff (4000 Hz); multiple time blocks + multiple row
    # tiles, exercising the carried filter state and row/time padding.
    B, L = 3, 2563                      # seg_len = 256, 3 trailing dropped
    audio = jax.random.uniform(k2, (B, L), jnp.float32, minval=-1.0, maxval=1.0)
    out = lf_forward(audio, cut_off_fre=4000, time_block=128, row_block=16)
    jax.block_until_ready(out)
    assert out.shape == (B, 2560), out.shape
    ref = _lf_forward_ref(audio, cut_off_fre=4000)
    err = float(jnp.max(jnp.abs(out - ref)))
    assert err < 2e-4, err

    # Test 3: test=True path (whole-waveform filtering, no segmentation).
    B, L = 2, 300
    audio = jax.random.uniform(k3, (B, L), jnp.float32, minval=-1.0, maxval=1.0)
    out = lf_forward(audio, cut_off_fre=4000, test=True, time_block=128)
    jax.block_until_ready(out)
    assert out.shape == (B, 300), out.shape
    ref = _lf_forward_ref(audio, cut_off_fre=4000, test=True)
    err = float(jnp.max(jnp.abs(out - ref)))
    assert err < 2e-4, err

    print("KERNEL_OK")
</pallas_src>

<mosaic_0001>
module attributes {stable_mosaic.version = 11 : i64} {
  func.func @_biquad_block_kernel(%arg0: i32, %arg1: i32, %arg2: memref<24x256xf32, #tpu.memory_space<vmem>>, %arg3: memref<256x256xbf16, #tpu.memory_space<vmem>>, %arg4: memref<256x256xbf16, #tpu.memory_space<vmem>>, %arg5: memref<8x256xf32, #tpu.memory_space<vmem>>, %arg6: memref<24x256xf32, #tpu.memory_space<vmem>>, %arg7: memref<24x1xf32, #tpu.memory_space<vmem>>, %arg8: memref<24x1xf32, #tpu.memory_space<vmem>>, %arg9: memref<24x1xf32, #tpu.memory_space<vmem>>, %arg10: memref<24x1xf32, #tpu.memory_space<vmem>>) attributes {dimension_semantics = [#tpu.dimension_semantics<parallel>, #tpu.dimension_semantics<arbitrary>], iteration_bounds = array<i64: 1, 1>, scalar_prefetch = 0 : i64, scratch_operands = 4 : i64, tpu.core_type = #tpu.core_type<tc>, window_params = [{transform_indices = @transform_0, window_bounds = array<i64: 24, 256>}, {pipeline_mode = #tpu.pipeline_mode<synchronous>, transform_indices = @transform_1, window_bounds = array<i64: 256, 256>}, {pipeline_mode = #tpu.pipeline_mode<synchronous>, transform_indices = @transform_2, window_bounds = array<i64: 256, 256>}, {pipeline_mode = #tpu.pipeline_mode<synchronous>, transform_indices = @transform_3, window_bounds = array<i64: 8, 256>}, {transform_indices = @transform_4, window_bounds = array<i64: 24, 256>}]} {
    %c0_i32 = arith.constant 0 : i32
    %0 = arith.cmpi eq, %arg1, %c0_i32 : i32
    %1 = arith.extui %0 : i1 to i32
    %c0_i32_0 = arith.constant 0 : i32
    %2 = arith.cmpi ne, %1, %c0_i32_0 : i32
    scf.if %2 {
      %cst_35 = arith.constant 0.000000e+00 : f32
      %53 = vector.broadcast %cst_35 : f32 to vector<24x1xf32>
      %c0_36 = arith.constant 0 : index
      %c0_37 = arith.constant 0 : index
      %54 = vector.load %arg7[%c0_36, %c0_37] : memref<24x1xf32, #tpu.memory_space<vmem>>, vector<24x1xf32>
      tpu.vector_store %arg7[%c0_36, %c0_37], %53 {strides = array<i32>} : memref<24x1xf32, #tpu.memory_space<vmem>>, vector<24x1xf32>,
      %cst_38 = arith.constant 0.000000e+00 : f32
      %55 = vector.broadcast %cst_38 : f32 to vector<24x1xf32>
      %c0_39 = arith.constant 0 : index
      %c0_40 = arith.constant 0 : index
      %56 = vector.load %arg8[%c0_39, %c0_40] : memref<24x1xf32, #tpu.memory_space<vmem>>, vector<24x1xf32>
      tpu.vector_store %arg8[%c0_39, %c0_40], %55 {strides = array<i32>} : memref<24x1xf32, #tpu.memory_space<vmem>>, vector<24x1xf32>,
      %cst_41 = arith.constant 0.000000e+00 : f32
      %57 = vector.broadcast %cst_41 : f32 to vector<24x1xf32>
      %c0_42 = arith.constant 0 : index
      %c0_43 = arith.constant 0 : index
      %58 = vector.load %arg9[%c0_42, %c0_43] : memref<24x1xf32, #tpu.memory_space<vmem>>, vector<24x1xf32>
      tpu.vector_store %arg9[%c0_42, %c0_43], %57 {strides = array<i32>} : memref<24x1xf32, #tpu.memory_space<vmem>>, vector<24x1xf32>,
      %cst_44 = arith.constant 0.000000e+00 : f32
      %59 = vector.broadcast %cst_44 : f32 to vector<24x1xf32>
      %c0_45 = arith.constant 0 : index
      %c0_46 = arith.constant 0 : index
      %60 = vector.load %arg10[%c0_45, %c0_46] : memref<24x1xf32, #tpu.memory_space<vmem>>, vector<24x1xf32>
      tpu.vector_store %arg10[%c0_45, %c0_46], %59 {strides = array<i32>} : memref<24x1xf32, #tpu.memory_space<vmem>>, vector<24x1xf32>,
    } else {
    }
    %c0 = arith.constant 0 : index
    %c0_1 = arith.constant 0 : index
    %3 = vector.load %arg2[%c0, %c0_1] : memref<24x256xf32, #tpu.memory_space<vmem>>, vector<24x256xf32>
    %4 = arith.truncf %3 : vector<24x256xf32> to vector<24x256xbf16>
    %5 = arith.extf %4 : vector<24x256xbf16> to vector<24x256xf32>
    %6 = arith.subf %3, %5 : vector<24x256xf32>
    %7 = arith.truncf %6 : vector<24x256xf32> to vector<24x256xbf16>
    %c0_2 = arith.constant 0 : index
    %c0_3 = arith.constant 0 : index
    %8 = vector.load %arg3[%c0_2, %c0_3] : memref<256x256xbf16, #tpu.memory_space<vmem>>, vector<256x256xbf16>
    %cst = arith.constant dense<0.000000e+00> : vector<24x256xf32>
    %9 = tpu.matmul %4, %8, %cst {dimension_numbers = #tpu.dot_dimension_numbers<[1], [0], [0], [1], [0, 0, 1, 1], [], []>} : vector<24x256xbf16>, vector<256x256xbf16>, vector<24x256xf32> -> vector<24x256xf32>
    %c0_4 = arith.constant 0 : index
    %c0_5 = arith.constant 0 : index
    %10 = vector.load %arg3[%c0_4, %c0_5] : memref<256x256xbf16, #tpu.memory_space<vmem>>, vector<256x256xbf16>
    %cst_6 = arith.constant dense<0.000000e+00> : vector<24x256xf32>
    %11 = tpu.matmul %7, %10, %cst_6 {dimension_numbers = #tpu.dot_dimension_numbers<[1], [0], [0], [1], [0, 0, 1, 1], [], []>} : vector<24x256xbf16>, vector<256x256xbf16>, vector<24x256xf32> -> vector<24x256xf32>
    %12 = arith.addf %9, %11 : vector<24x256xf32>
    %c0_7 = arith.constant 0 : index
    %c0_8 = arith.constant 0 : index
    %13 = vector.load %arg4[%c0_7, %c0_8] : memref<256x256xbf16, #tpu.memory_space<vmem>>, vector<256x256xbf16>
    %cst_9 = arith.constant dense<0.000000e+00> : vector<24x256xf32>
    %14 = tpu.matmul %4, %13, %cst_9 {dimension_numbers = #tpu.dot_dimension_numbers<[1], [0], [0], [1], [0, 0, 1, 1], [], []>} : vector<24x256xbf16>, vector<256x256xbf16>, vector<24x256xf32> -> vector<24x256xf32>
    %15 = arith.addf %12, %14 : vector<24x256xf32>
    %c0_10 = arith.constant 0 : index
    %c0_11 = arith.constant 0 : index
    %16 = vector.load %arg7[%c0_10, %c0_11] : memref<24x1xf32, #tpu.memory_space<vmem>>, vector<24x1xf32>
    %c0_12 = arith.constant 0 : index
    %c0_13 = arith.constant 0 : index
    %17 = vector.load %arg5[%c0_12, %c0_13] : memref<8x256xf32, #tpu.memory_space<vmem>>, vector<1x256xf32>
    %18 = vector.broadcast %16 : vector<24x1xf32> to vector<24x256xf32>
    %19 = vector.broadcast %17 : vector<1x256xf32> to vector<24x256xf32>
    %20 = arith.mulf %18, %19 : vector<24x256xf32>
    %21 = arith.addf %15, %20 : vector<24x256xf32>
    %c0_14 = arith.constant 0 : index
    %c0_15 = arith.constant 0 : index
    %22 = vector.load %arg8[%c0_14, %c0_15] : memref<24x1xf32, #tpu.memory_space<vmem>>, vector<24x1xf32>
    %c1 = arith.constant 1 : index
    %c0_16 = arith.constant 0 : index
    %23 = vector.load %arg5[%c1, %c0_16] : memref<8x256xf32, #tpu.memory_space<vmem>>, vector<1x256xf32>
    %24 = vector.broadcast %22 : vector<24x1xf32> to vector<24x256xf32>
    %25 = vector.broadcast %23 : vector<1x256xf32> to vector<24x256xf32>
    %26 = arith.mulf %24, %25 : vector<24x256xf32>
    %27 = arith.addf %21, %26 : vector<24x256xf32>
    %c0_17 = arith.constant 0 : index
    %c0_18 = arith.constant 0 : index
    %28 = vector.load %arg9[%c0_17, %c0_18] : memref<24x1xf32, #tpu.memory_space<vmem>>, vector<24x1xf32>
    %c2 = arith.constant 2 : index
    %c0_19 = arith.constant 0 : index
    %29 = vector.load %arg5[%c2, %c0_19] : memref<8x256xf32, #tpu.memory_space<vmem>>, vector<1x256xf32>
    %30 = vector.broadcast %28 : vector<24x1xf32> to vector<24x256xf32>
    %31 = vector.broadcast %29 : vector<1x256xf32> to vector<24x256xf32>
    %32 = arith.mulf %30, %31 : vector<24x256xf32>
    %33 = arith.addf %27, %32 : vector<24x256xf32>
    %c0_20 = arith.constant 0 : index
    %c0_21 = arith.constant 0 : index
    %34 = vector.load %arg10[%c0_20, %c0_21] : memref<24x1xf32, #tpu.memory_space<vmem>>, vector<24x1xf32>
    %c3 = arith.constant 3 : index
    %c0_22 = arith.constant 0 : index
    %35 = vector.load %arg5[%c3, %c0_22] : memref<8x256xf32, #tpu.memory_space<vmem>>, vector<1x256xf32>
    %36 = vector.broadcast %34 : vector<24x1xf32> to vector<24x256xf32>
    %37 = vector.broadcast %35 : vector<1x256xf32> to vector<24x256xf32>
    %38 = arith.mulf %36, %37 : vector<24x256xf32>
    %39 = arith.addf %33, %38 : vector<24x256xf32>
    %40 = vector.extract_strided_slice %3 {offsets = [0, 255], sizes = [24, 1], strides = [1, 1]} : vector<24x256xf32> to vector<24x1xf32>
    %c0_23 = arith.constant 0 : index
    %c0_24 = arith.constant 0 : index
    %41 = vector.load %arg7[%c0_23, %c0_24] : memref<24x1xf32, #tpu.memory_space<vmem>>, vector<24x1xf32>
    tpu.vector_store %arg7[%c0_23, %c0_24], %40 {strides = array<i32>} : memref<24x1xf32, #tpu.memory_space<vmem>>, vector<24x1xf32>,
    %42 = vector.extract_strided_slice %3 {offsets = [0, 254], sizes = [24, 1], strides = [1, 1]} : vector<24x256xf32> to vector<24x1xf32>
    %c0_25 = arith.constant 0 : index
    %c0_26 = arith.constant 0 : index
    %43 = vector.load %arg8[%c0_25, %c0_26] : memref<24x1xf32, #tpu.memory_space<vmem>>, vector<24x1xf32>
    tpu.vector_store %arg8[%c0_25, %c0_26], %42 {strides = array<i32>} : memref<24x1xf32, #tpu.memory_space<vmem>>, vector<24x1xf32>,
    %44 = vector.extract_strided_slice %39 {offsets = [0, 255], sizes = [24, 1], strides = [1, 1]} : vector<24x256xf32> to vector<24x1xf32>
    %c0_27 = arith.constant 0 : index
    %c0_28 = arith.constant 0 : index
    %45 = vector.load %arg9[%c0_27, %c0_28] : memref<24x1xf32, #tpu.memory_space<vmem>>, vector<24x1xf32>
    tpu.vector_store %arg9[%c0_27, %c0_28], %44 {strides = array<i32>} : memref<24x1xf32, #tpu.memory_space<vmem>>, vector<24x1xf32>,
    %46 = vector.extract_strided_slice %39 {offsets = [0, 254], sizes = [24, 1], strides = [1, 1]} : vector<24x256xf32> to vector<24x1xf32>
    %c0_29 = arith.constant 0 : index
    %c0_30 = arith.constant 0 : index
    %47 = vector.load %arg10[%c0_29, %c0_30] : memref<24x1xf32, #tpu.memory_space<vmem>>, vector<24x1xf32>
    tpu.vector_store %arg10[%c0_29, %c0_30], %46 {strides = array<i32>} : memref<24x1xf32, #tpu.memory_space<vmem>>, vector<24x1xf32>,
    %cst_31 = arith.constant -1.000000e+00 : f32
    %cst_32 = arith.constant 1.000000e+00 : f32
    %48 = vector.broadcast %cst_31 : f32 to vector<24x256xf32>
    %49 = arith.maximumf %48, %39 : vector<24x256xf32>
    %50 = vector.broadcast %cst_32 : f32 to vector<24x256xf32>
    %51 = arith.minimumf %50, %49 : vector<24x256xf32>
    %c0_33 = arith.constant 0 : index
    %c0_34 = arith.constant 0 : index
    %52 = vector.load %arg6[%c0_33, %c0_34] : memref<24x256xf32, #tpu.memory_space<vmem>>, vector<24x256xf32>
    tpu.vector_store %arg6[%c0_33, %c0_34], %51 {strides = array<i32>} : memref<24x256xf32, #tpu.memory_space<vmem>>, vector<24x256xf32>,
    return
  }
  func.func @transform_0(%arg0: i32, %arg1: i32) -> (i32, i32) {
    %c0_i32 = arith.constant 0 : i32
    return %arg0, %arg1 : i32, i32
  }
  func.func @transform_1(%arg0: i32, %arg1: i32) -> (i32, i32) {
    %c0_i32 = arith.constant 0 : i32
    %c0_i32_0 = arith.constant 0 : i32
    %c0_i32_1 = arith.constant 0 : i32
    return %c0_i32, %c0_i32_0 : i32, i32
  }
  func.func @transform_2(%arg0: i32, %arg1: i32) -> (i32, i32) {
    %c0_i32 = arith.constant 0 : i32
    %c0_i32_0 = arith.constant 0 : i32
    %c0_i32_1 = arith.constant 0 : i32
    return %c0_i32, %c0_i32_0 : i32, i32
  }
  func.func @transform_3(%arg0: i32, %arg1: i32) -> (i32, i32) {
    %c0_i32 = arith.constant 0 : i32
    %c0_i32_0 = arith.constant 0 : i32
    %c0_i32_1 = arith.constant 0 : i32
    return %c0_i32, %c0_i32_0 : i32, i32
  }
  func.func @transform_4(%arg0: i32, %arg1: i32) -> (i32, i32) {
    %c0_i32 = arith.constant 0 : i32
    return %arg0, %arg1 : i32, i32
  }
}

</mosaic_0001>

<llo_original>
// kernel: tpu_custom_call.1
$region0: #{tpu_custom_call.1}
  #allocation0 [shape = 'u32[]', space=smem, size = 0x4, offset = 0x4, fixed_abs, tag = 'smem constant byte address 0x4 - core index']
  #allocation1 [shape = 'u32[144,128]{1,0:T(1,128)}', space=vmem, size = 0x12000, scoped, tag = 'internal scratch']
  #allocation2 [shape = 'f32[24,1]{1,0:T(8,128)}', space=vmem, size = 0x3000, scoped, tag = 'scratch operand']
  #allocation3 [shape = 'f32[24,1]{1,0:T(8,128)}', space=vmem, size = 0x3000, scoped, tag = 'scratch operand']
  #allocation4 [shape = 'f32[24,1]{1,0:T(8,128)}', space=vmem, size = 0x3000, scoped, tag = 'scratch operand']
  #allocation5 [shape = 'f32[24,1]{1,0:T(8,128)}', space=vmem, size = 0x3000, scoped, tag = 'scratch operand']
  %s0 = inlined_call_operand.hbm [shape: f32[24,256], index: 0, kind: input, shape index: {}]
  %s1 = inlined_call_operand.hbm [shape: bf16[256,256], index: 1, kind: input, shape index: {}]
  %s2 = inlined_call_operand.hbm [shape: bf16[256,256], index: 2, kind: input, shape index: {}]
  %s3 = inlined_call_operand.hbm [shape: f32[8,256], index: 3, kind: input, shape index: {}]
  %s4 = inlined_call_operand.hbm [shape: f32[24,256], index: 4, kind: output, shape index: {}]
  %s5 = sld [smem:[#allocation0]]
  $region46: #{tpu_custom_call.1} parent=0
    _
  %s7 = ssub.s32 1, %s5
  %s8 = scalar_select 0, %s7, %s5
  $region1: #{tpu_custom_call.1} parent=0
    #allocation6 [shape = 'u8[24576]{0}', space=vmem, size = 0x6000, scoped, tag = 'input window, operand 0, single buffered']
    #allocation7 [shape = 's32[1]{0}', space=sflag, size = 0x4, scoped, tag = 'scoped memory for tpu_custom_call.1']
    #allocation8 [shape = 's32[1]{0}', space=sflag, size = 0x4, scoped, tag = 'scoped memory for tpu_custom_call.1']
    #allocation9 [shape = 'u8[131072]{0}', space=vmem, size = 0x20000, scoped, tag = 'input window, operand 1, single buffered']
    #allocation10 [shape = 's32[1]{0}', space=sflag, size = 0x4, scoped, tag = 'scoped memory for tpu_custom_call.1']
    #allocation11 [shape = 'u8[131072]{0}', space=vmem, size = 0x20000, scoped, tag = 'input window, operand 2, single buffered']
    #allocation12 [shape = 'u8[8192]{0}', space=vmem, size = 0x2000, scoped, tag = 'input window, operand 3, single buffered']
    #allocation13 [shape = 's32[1]{0}', space=sflag, size = 0x4, scoped, tag = 'scoped memory for tpu_custom_call.1']
    #allocation14 [shape = 'u8[24576]{0}', space=vmem, size = 0x6000, scoped, tag = 'output window, operand 0, single buffered']
    %9 = vsyncpa [#allocation7], 0
    %10 = vsyncpa [#allocation10], 0
    %11 = vsyncpa [#allocation13], 0
    %12 = vsyncpa [#allocation8], 0
    // Predicated region
    $region2: #{tpu_custom_call.1} parent=1 // pred_check
      _
    $region3: #{tpu_custom_call.1} parent=1 // pred_check_branch
      %14 = sbr.rel (0) target = $region5
    $region4: #{tpu_custom_call.1} parent=1 // pred_region
      %s16 = ssub.s32 768, 768
      %17 = vsyncadd [#allocation7], %s16
      %s18 = sshll.u32 [#allocation6], 4
      %s19 = int_to_ptr.vmem [resolvable:$true] %s18
      %24 = dma.hbm_to_vmem [thread:$0]  %s0, 768, %s19, [#allocation7], 256, 256, 16
    $region5: #{tpu_custom_call.1} parent=1 // pred_fallthru
      _
    // Predicated region
    $region6: #{tpu_custom_call.1} parent=1 // pred_check
      _
    $region7: #{tpu_custom_call.1} parent=1 // pred_check_branch
      %26 = sbr.rel (0) target = $region9
    $region8: #{tpu_custom_call.1} parent=1 // pred_region
      %s28 = ssub.s32 4096, 4096
      %29 = vsyncadd [#allocation10], %s28
      %s30 = sshll.u32 [#allocation9], 4
      %s31 = int_to_ptr.vmem [resolvable:$true] %s30
      %36 = dma.hbm_to_vmem [thread:$0]  %s1, 4096, %s31, [#allocation10], 128, 128, 8
    $region9: #{tpu_custom_call.1} parent=1 // pred_fallthru
      _
    // Predicated region
    $region10: #{tpu_custom_call.1} parent=1 // pred_check
      _
    $region11: #{tpu_custom_call.1} parent=1 // pred_check_branch
      %38 = sbr.rel (0) target = $region13
    $region12: #{tpu_custom_call.1} parent=1 // pred_region
      %s40 = ssub.s32 4096, 4096
      %41 = vsyncadd [#allocation10], %s40
      %s42 = sshll.u32 [#allocation11], 4
      %s43 = int_to_ptr.vmem [resolvable:$true] %s42
      %48 = dma.hbm_to_vmem [thread:$0]  %s2, 4096, %s43, [#allocation10], 128, 128, 8
    $region13: #{tpu_custom_call.1} parent=1 // pred_fallthru
      _
    // Predicated region
    $region14: #{tpu_custom_call.1} parent=1 // pred_check
      _
    $region15: #{tpu_custom_call.1} parent=1 // pred_check_branch
      %50 = sbr.rel (0) target = $region17
    $region16: #{tpu_custom_call.1} parent=1 // pred_region
      %s52 = ssub.s32 256, 256
      %53 = vsyncadd [#allocation13], %s52
      %s55 = sshll.u32 [#allocation12], 4
      %s56 = int_to_ptr.vmem [resolvable:$true] %s55
      %58 = dma.hbm_to_vmem [thread:$0]  %s3, 256, %s56, [#allocation13]
    $region17: #{tpu_custom_call.1} parent=1 // pred_fallthru
      _
    // Predicated region
    $region18: #{tpu_custom_call.1} parent=1 // pred_check
      _
    $region19: #{tpu_custom_call.1} parent=1 // pred_check_branch
      %60 = sbr.rel (0) target = $region21
    $region20: #{tpu_custom_call.1} parent=1 // pred_region
      %61 = dma.done [#allocation7], 768
    $region21: #{tpu_custom_call.1} parent=1 // pred_fallthru
      _
    // Predicated region
    $region22: #{tpu_custom_call.1} parent=1 // pred_check
      _
    $region23: #{tpu_custom_call.1} parent=1 // pred_check_branch
      %63 = sbr.rel (0) target = $region25
    $region24: #{tpu_custom_call.1} parent=1 // pred_region
      %64 = dma.done [#allocation10], 4096
    $region25: #{tpu_custom_call.1} parent=1 // pred_fallthru
      _
    // Predicated region
    $region26: #{tpu_custom_call.1} parent=1 // pred_check
      _
    $region27: #{tpu_custom_call.1} parent=1 // pred_check_branch
      %66 = sbr.rel (0) target = $region29
    $region28: #{tpu_custom_call.1} parent=1 // pred_region
      %67 = dma.done [#allocation10], 4096
    $region29: #{tpu_custom_call.1} parent=1 // pred_fallthru
      _
    // Predicated region
    $region30: #{tpu_custom_call.1} parent=1 // pred_check
      _
    $region31: #{tpu_custom_call.1} parent=1 // pred_check_branch
      %69 = sbr.rel (0) target = $region33
    $region32: #{tpu_custom_call.1} parent=1 // pred_region
      %70 = dma.done [#allocation13], 256
    $region33: #{tpu_custom_call.1} parent=1 // pred_fallthru
      _
    %p71 = scmp.eq.s32.totalorder 0, 0
    // Predicated region
    $region34: #{tpu_custom_call.1} parent=1 // pred_check
      %p72 = pneg %p71
    $region35: #{tpu_custom_call.1} parent=1 // pred_check_branch
      %74 = sbr.rel (%p72) target = $region37
    $region36: #{tpu_custom_call.1} parent=1 // pred_region
      %vm75 = vcmask 7168
      %76 = vst.msk [vmem:[#allocation2] sm:$0xff] %vm75, 0.0
      %77 = vst.msk [vmem:[#allocation2 + $0x8] sm:$0xff] %vm75, 0.0
      %78 = vst.msk [vmem:[#allocation2 + $0x10] sm:$0xff] %vm75, 0.0
      %79 = vst.msk [vmem:[#allocation3] sm:$0xff] %vm75, 0.0
      %80 = vst.msk [vmem:[#allocation3 + $0x8] sm:$0xff] %vm75, 0.0
      %81 = vst.msk [vmem:[#allocation3 + $0x10] sm:$0xff] %vm75, 0.0
      %82 = vst.msk [vmem:[#allocation4] sm:$0xff] %vm75, 0.0
      %83 = vst.msk [vmem:[#allocation4 + $0x8] sm:$0xff] %vm75, 0.0
      %84 = vst.msk [vmem:[#allocation4 + $0x10] sm:$0xff] %vm75, 0.0
      %85 = vst.msk [vmem:[#allocation5] sm:$0xff] %vm75, 0.0
      %86 = vst.msk [vmem:[#allocation5 + $0x8] sm:$0xff] %vm75, 0.0
      %87 = vst.msk [vmem:[#allocation5 + $0x10] sm:$0xff] %vm75, 0.0
    $region37: #{tpu_custom_call.1} parent=1 // pred_fallthru
      _
    %v88 = vld [vmem:[#allocation6] sm:$0xff]
    %v89 = vld [vmem:[#allocation6 + $0x8] sm:$0xff]
    %v90 = vld [vmem:[#allocation6 + $0x10] sm:$0xff]
    %v91 = vld [vmem:[#allocation6 + $0x18] sm:$0xff]
    %v92 = vld [vmem:[#allocation6 + $0x20] sm:$0xff]
    %v93 = vld [vmem:[#allocation6 + $0x28] sm:$0xff]
    %v94 = vpack.c.bf16 %v90, %v88
    %v95 = vpack.c.bf16 %v91, %v89
    %v96 = vpack.c.bf16 %v92, %v92
    %v97 = vpack.c.bf16 %v93, %v93
    %v98 = vunpack.c.l.bf16 %v94
    %v99 = vunpack.c.l.bf16 %v95
    %v100 = vunpack.c.h.bf16 %v94
    %v101 = vunpack.c.h.bf16 %v95
    %v102 = vunpack.c.l.bf16 %v96
    %v103 = vunpack.c.l.bf16 %v97
    %v104 = vsub.f32 %v88, %v98
    %v105 = vsub.f32 %v89, %v99
    %v106 = vsub.f32 %v90, %v100
    %v107 = vsub.f32 %v91, %v101
    %v108 = vsub.f32 %v92, %v102
    %v109 = vsub.f32 %v93, %v103
    %v110 = vpack.c.bf16 %v106, %v104
    %v111 = vpack.c.bf16 %v107, %v105
    %v112 = vpack.c.bf16 %v108, %v108
    %v113 = vpack.c.bf16 %v109, %v109
    %v114 = vld [vmem:[#allocation9] sm:$0xff]
    %v115 = vld [vmem:[#allocation9 + $0x8] sm:$0xff]
    %v116 = vld [vmem:[#allocation9 + $0x10] sm:$0xff]
    %v117 = vld [vmem:[#allocation9 + $0x18] sm:$0xff]
    %v118 = vld [vmem:[#allocation9 + $0x20] sm:$0xff]
    %v119 = vld [vmem:[#allocation9 + $0x28] sm:$0xff]
    %v120 = vld [vmem:[#allocation9 + $0x30] sm:$0xff]
    %v121 = vld [vmem:[#allocation9 + $0x38] sm:$0xff]
    %v122 = vld [vmem:[#allocation9 + $0x40] sm:$0xff]
    %v123 = vld [vmem:[#allocation9 + $0x48] sm:$0xff]
    %v124 = vld [vmem:[#allocation9 + $0x50] sm:$0xff]
    %v125 = vld [vmem:[#allocation9 + $0x58] sm:$0xff]
    %v126 = vld [vmem:[#allocation9 + $0x60] sm:$0xff]
    %v127 = vld [vmem:[#allocation9 + $0x68] sm:$0xff]
    %v128 = vld [vmem:[#allocation9 + $0x70] sm:$0xff]
    %v129 = vld [vmem:[#allocation9 + $0x78] sm:$0xff]
    %v130 = vld [vmem:[#allocation9 + $0x80] sm:$0xff]
    %v131 = vld [vmem:[#allocation9 + $0x88] sm:$0xff]
    %v132 = vld [vmem:[#allocation9 + $0x90] sm:$0xff]
    %v133 = vld [vmem:[#allocation9 + $0x98] sm:$0xff]
    %v134 = vld [vmem:[#allocation9 + $0xa0] sm:$0xff]
    %v135 = vld [vmem:[#allocation9 + $0xa8] sm:$0xff]
    %v136 = vld [vmem:[#allocation9 + $0xb0] sm:$0xff]
    %v137 = vld [vmem:[#allocation9 + $0xb8] sm:$0xff]
    %v138 = vld [vmem:[#allocation9 + $0xc0] sm:$0xff]
    %v139 = vld [vmem:[#allocation9 + $0xc8] sm:$0xff]
    %v140 = vld [vmem:[#allocation9 + $0xd0] sm:$0xff]
    %v141 = vld [vmem:[#allocation9 + $0xd8] sm:$0xff]
    %v142 = vld [vmem:[#allocation9 + $0xe0] sm:$0xff]
    %v143 = vld [vmem:[#allocation9 + $0xe8] sm:$0xff]
    %v144 = vld [vmem:[#allocation9 + $0xf0] sm:$0xff]
    %v145 = vld [vmem:[#allocation9 + $0xf8] sm:$0xff]
    %v178 = vunpack.c.l.b16 %v114
    %v179 = vunpack.c.h.b16 %v114
    %v180 = vunpack.c.l.b16 %v115
    %v181 = vunpack.c.h.b16 %v115
    %v182 = vunpack.c.l.b16 %v116
    %v183 = vunpack.c.h.b16 %v116
    %v184 = vunpack.c.l.b16 %v117
    %v185 = vunpack.c.h.b16 %v117
    %v186 = vunpack.c.l.b16 %v118
    %v187 = vunpack.c.h.b16 %v118
    %v188 = vunpack.c.l.b16 %v119
    %v189 = vunpack.c.h.b16 %v119
    %v190 = vunpack.c.l.b16 %v120
    %v191 = vunpack.c.h.b16 %v120
    %v192 = vunpack.c.l.b16 %v121
    %v193 = vunpack.c.h.b16 %v121
    %v194 = vunpack.c.l.b16 %v122
    %v195 = vunpack.c.h.b16 %v122
    %v196 = vunpack.c.l.b16 %v123
    %v197 = vunpack.c.h.b16 %v123
    %v198 = vunpack.c.l.b16 %v124
    %v199 = vunpack.c.h.b16 %v124
    %v200 = vunpack.c.l.b16 %v125
    %v201 = vunpack.c.h.b16 %v125
    %v202 = vunpack.c.l.b16 %v126
    %v203 = vunpack.c.h.b16 %v126
    %v204 = vunpack.c.l.b16 %v127
    %v205 = vunpack.c.h.b16 %v127
    %v206 = vunpack.c.l.b16 %v128
    %v207 = vunpack.c.h.b16 %v128
    %v208 = vunpack.c.l.b16 %v129
    %v209 = vunpack.c.h.b16 %v129
    %v210 = vunpack.c.l.b16 %v130
    %v211 = vunpack.c.h.b16 %v130
    %v212 = vunpack.c.l.b16 %v131
    %v213 = vunpack.c.h.b16 %v131
    %v214 = vunpack.c.l.b16 %v132
    %v215 = vunpack.c.h.b16 %v132
    %v216 = vunpack.c.l.b16 %v133
    %v217 = vunpack.c.h.b16 %v133
    %v218 = vunpack.c.l.b16 %v134
    %v219 = vunpack.c.h.b16 %v134
    %v220 = vunpack.c.l.b16 %v135
    %v221 = vunpack.c.h.b16 %v135
    %v222 = vunpack.c.l.b16 %v136
    %v223 = vunpack.c.h.b16 %v136
    %v224 = vunpack.c.l.b16 %v137
    %v225 = vunpack.c.h.b16 %v137
    %v226 = vunpack.c.l.b16 %v138
    %v227 = vunpack.c.h.b16 %v138
    %v228 = vunpack.c.l.b16 %v139
    %v229 = vunpack.c.h.b16 %v139
    %v230 = vunpack.c.l.b16 %v140
    %v231 = vunpack.c.h.b16 %v140
    %v232 = vunpack.c.l.b16 %v141
    %v233 = vunpack.c.h.b16 %v141
    %v234 = vunpack.c.l.b16 %v142
    %v235 = vunpack.c.h.b16 %v142
    %v236 = vunpack.c.l.b16 %v143
    %v237 = vunpack.c.h.b16 %v143
    %v238 = vunpack.c.l.b16 %v144
    %v239 = vunpack.c.h.b16 %v144
    %v240 = vunpack.c.l.b16 %v145
    %v241 = vunpack.c.h.b16 %v145
    %v242 = vpack.c.b16 %v180, %v178
    %v243 = vpack.c.b16 %v181, %v179
    %v244 = vpack.c.b16 %v184, %v182
    %v245 = vpack.c.b16 %v185, %v183
    %v246 = vpack.c.b16 %v188, %v186
    %v247 = vpack.c.b16 %v189, %v187
    %v248 = vpack.c.b16 %v192, %v190
    %v249 = vpack.c.b16 %v193, %v191
    %v250 = vpack.c.b16 %v196, %v194
    %v251 = vpack.c.b16 %v197, %v195
    %v252 = vpack.c.b16 %v200, %v198
    %v253 = vpack.c.b16 %v201, %v199
    %v254 = vpack.c.b16 %v204, %v202
    %v255 = vpack.c.b16 %v205, %v203
    %v256 = vpack.c.b16 %v208, %v206
    %v257 = vpack.c.b16 %v209, %v207
    %v258 = vpack.c.b16 %v212, %v210
    %v259 = vpack.c.b16 %v213, %v211
    %v260 = vpack.c.b16 %v216, %v214
    %v261 = vpack.c.b16 %v217, %v215
    %v262 = vpack.c.b16 %v220, %v218
    %v263 = vpack.c.b16 %v221, %v219
    %v264 = vpack.c.b16 %v224, %v222
    %v265 = vpack.c.b16 %v225, %v223
    %v266 = vpack.c.b16 %v228, %v226
    %v267 = vpack.c.b16 %v229, %v227
    %v268 = vpack.c.b16 %v232, %v230
    %v269 = vpack.c.b16 %v233, %v231
    %v270 = vpack.c.b16 %v236, %v234
    %v271 = vpack.c.b16 %v237, %v235
    %v272 = vpack.c.b16 %v240, %v238
    %v273 = vpack.c.b16 %v241, %v239
    %306 = vmatprep.subr.bf16.mxu0 %v257
    %307 = vmatpush1.bf16.msra.mxu0 %v256
    %308 = vmatprep.subr.bf16.mxu0 %v255
    %309 = vmatpush1.bf16.msra.mxu0 %v254
    %310 = vmatprep.subr.bf16.mxu0 %v253
    %311 = vmatpush1.bf16.msra.mxu0 %v252
    %312 = vmatprep.subr.bf16.mxu0 %v251
    %313 = vmatpush1.bf16.msra.mxu0 %v250
    %314 = vmatprep.subr.bf16.mxu0 %v249
    %315 = vmatpush1.bf16.msra.mxu0 %v248
    %316 = vmatprep.subr.bf16.mxu0 %v247
    %317 = vmatpush1.bf16.msra.mxu0 %v246
    %318 = vmatprep.subr.bf16.mxu0 %v245
    %319 = vmatpush1.bf16.msra.mxu0 %v244
    %320 = vmatprep.subr.bf16.mxu0 %v243
    %321 = vmatpush1.bf16.msra.mxu0 %v242
    %322 = vmatprep.subr.bf16.mxu0 %v273
    %323 = vmatpush2.bf16.msra.mxu0 %v272
    %324 = vmatprep.subr.bf16.mxu0 %v271
    %325 = vmatpush2.bf16.msra.mxu0 %v270
    %326 = vmatprep.subr.bf16.mxu0 %v269
    %327 = vmatpush2.bf16.msra.mxu0 %v268
    %328 = vmatprep.subr.bf16.mxu0 %v267
    %329 = vmatpush2.bf16.msra.mxu0 %v266
    %330 = vmatprep.subr.bf16.mxu0 %v265
    %331 = vmatpush2.bf16.msra.mxu0 %v264
    %332 = vmatprep.subr.bf16.mxu0 %v263
    %333 = vmatpush2.bf16.msra.mxu0 %v262
    %334 = vmatprep.subr.bf16.mxu0 %v261
    %335 = vmatpush2.bf16.msra.mxu0 %v260
    %336 = vmatprep.subr.bf16.mxu0 %v259
    %337 = vmatpush2.bf16.msra.mxu0 %v258
    %338 = vmatprep.mubr.bf16.mxu0 %v111
    %339 = vmatmul.mubr.bf16.gmra.mxu0 %v110
    %v340 = vpop.f32.mrf.mxu0
    %v341 = vadd.f32 0.0, %v340
    %v342 = vpop.f32.mrf.mxu0
    %v343 = vadd.f32 0.0, %v342
    %v344 = vpop.f32.mrf.mxu0
    %v345 = vadd.f32 0.0, %v344
    %v346 = vpop.f32.mrf.mxu0
    %v347 = vadd.f32 0.0, %v346
    %348 = vmatprep.mubr.bf16.mxu0 %v113
    %349 = vmatmul.mubr.bf16.gmra.mxu0 %v112
    %v350 = vpop.f32.mrf.mxu0
    %v351 = vadd.f32 0.0, %v350
    %v352 = vpop.f32.mrf.mxu0
    %v353 = vadd.f32 0.0, %v352
    %v354 = vpop.f32.mrf.mxu0
    %v355 = vpop.f32.mrf.mxu0
    %356 = vdwg.mxu0
    %357 = vmatprep.subr.bf16.mxu0 %v257
    %358 = vmatpush1.bf16.msra.mxu0 %v256
    %359 = vmatprep.subr.bf16.mxu0 %v255
    %360 = vmatpush1.bf16.msra.mxu0 %v254
    %361 = vmatprep.subr.bf16.mxu0 %v253
    %362 = vmatpush1.bf16.msra.mxu0 %v252
    %363 = vmatprep.subr.bf16.mxu0 %v251
    %364 = vmatpush1.bf16.msra.mxu0 %v250
    %365 = vmatprep.subr.bf16.mxu0 %v249
    %366 = vmatpush1.bf16.msra.mxu0 %v248
    %367 = vmatprep.subr.bf16.mxu0 %v247
    %368 = vmatpush1.bf16.msra.mxu0 %v246
    %369 = vmatprep.subr.bf16.mxu0 %v245
    %370 = vmatpush1.bf16.msra.mxu0 %v244
    %371 = vmatprep.subr.bf16.mxu0 %v243
    %372 = vmatpush1.bf16.msra.mxu0 %v242
    %373 = vmatprep.subr.bf16.mxu0 %v273
    %374 = vmatpush2.bf16.msra.mxu0 %v272
    %375 = vmatprep.subr.bf16.mxu0 %v271
    %376 = vmatpush2.bf16.msra.mxu0 %v270
    %377 = vmatprep.subr.bf16.mxu0 %v269
    %378 = vmatpush2.bf16.msra.mxu0 %v268
    %379 = vmatprep.subr.bf16.mxu0 %v267
    %380 = vmatpush2.bf16.msra.mxu0 %v266
    %381 = vmatprep.subr.bf16.mxu0 %v265
    %382 = vmatpush2.bf16.msra.mxu0 %v264
    %383 = vmatprep.subr.bf16.mxu0 %v263
    %384 = vmatpush2.bf16.msra.mxu0 %v262
    %385 = vmatprep.subr.bf16.mxu0 %v261
    %386 = vmatpush2.bf16.msra.mxu0 %v260
    %387 = vmatprep.subr.bf16.mxu0 %v259
    %388 = vmatpush2.bf16.msra.mxu0 %v258
    %389 = vmatprep.mubr.bf16.mxu0 %v95
    %390 = vmatmul.mubr.bf16.gmra.mxu0 %v94
    %v391 = vpop.f32.mrf.mxu0
    %v392 = vadd.f32 %v341, %v391
    %v393 = vpop.f32.mrf.mxu0
    %v394 = vadd.f32 %v343, %v393
    %v395 = vpop.f32.mrf.mxu0
    %v396 = vadd.f32 %v345, %v395
    %v397 = vpop.f32.mrf.mxu0
    %v398 = vadd.f32 %v347, %v397
    %399 = vmatprep.mubr.bf16.mxu0 %v97
    %400 = vmatmul.mubr.bf16.gmra.mxu0 %v96
    %v401 = vpop.f32.mrf.mxu0
    %v402 = vadd.f32 %v351, %v401
    %v403 = vpop.f32.mrf.mxu0
    %v404 = vadd.f32 %v353, %v403
    %v405 = vpop.f32.mrf.mxu0
    %v406 = vpop.f32.mrf.mxu0
    %407 = vdwg.mxu0
    %v408 = vld [vmem:[#allocation11] sm:$0xff]
    %v409 = vld [vmem:[#allocation11 + $0x8] sm:$0xff]
    %v410 = vld [vmem:[#allocation11 + $0x10] sm:$0xff]
    %v411 = vld [vmem:[#allocation11 + $0x18] sm:$0xff]
    %v412 = vld [vmem:[#allocation11 + $0x20] sm:$0xff]
    %v413 = vld [vmem:[#allocation11 + $0x28] sm:$0xff]
    %v414 = vld [vmem:[#allocation11 + $0x30] sm:$0xff]
    %v415 = vld [vmem:[#allocation11 + $0x38] sm:$0xff]
    %v416 = vld [vmem:[#allocation11 + $0x40] sm:$0xff]
    %v417 = vld [vmem:[#allocation11 + $0x48] sm:$0xff]
    %v418 = vld [vmem:[#allocation11 + $0x50] sm:$0xff]
    %v419 = vld [vmem:[#allocation11 + $0x58] sm:$0xff]
    %v420 = vld [vmem:[#allocation11 + $0x60] sm:$0xff]
    %v421 = vld [vmem:[#allocation11 + $0x68] sm:$0xff]
    %v422 = vld [vmem:[#allocation11 + $0x70] sm:$0xff]
    %v423 = vld [vmem:[#allocation11 + $0x78] sm:$0xff]
    %v424 = vld [vmem:[#allocation11 + $0x80] sm:$0xff]
    %v425 = vld [vmem:[#allocation11 + $0x88] sm:$0xff]
    %v426 = vld [vmem:[#allocation11 + $0x90] sm:$0xff]
    %v427 = vld [vmem:[#allocation11 + $0x98] sm:$0xff]
    %v428 = vld [vmem:[#allocation11 + $0xa0] sm:$0xff]
    %v429 = vld [vmem:[#allocation11 + $0xa8] sm:$0xff]
    %v430 = vld [vmem:[#allocation11 + $0xb0] sm:$0xff]
    %v431 = vld [vmem:[#allocation11 + $0xb8] sm:$0xff]
    %v432 = vld [vmem:[#allocation11 + $0xc0] sm:$0xff]
    %v433 = vld [vmem:[#allocation11 + $0xc8] sm:$0xff]
    %v434 = vld [vmem:[#allocation11 + $0xd0] sm:$0xff]
    %v435 = vld [vmem:[#allocation11 + $0xd8] sm:$0xff]
    %v436 = vld [vmem:[#allocation11 + $0xe0] sm:$0xff]
    %v437 = vld [vmem:[#allocation11 + $0xe8] sm:$0xff]
    %v438 = vld [vmem:[#allocation11 + $0xf0] sm:$0xff]
    %v439 = vld [vmem:[#allocation11 + $0xf8] sm:$0xff]
    %v472 = vunpack.c.l.b16 %v408
    %v473 = vunpack.c.h.b16 %v408
    %v474 = vunpack.c.l.b16 %v409
    %v475 = vunpack.c.h.b16 %v409
    %v476 = vunpack.c.l.b16 %v410
    %v477 = vunpack.c.h.b16 %v410
    %v478 = vunpack.c.l.b16 %v411
    %v479 = vunpack.c.h.b16 %v411
    %v480 = vunpack.c.l.b16 %v412
    %v481 = vunpack.c.h.b16 %v412
    %v482 = vunpack.c.l.b16 %v413
    %v483 = vunpack.c.h.b16 %v413
    %v484 = vunpack.c.l.b16 %v414
    %v485 = vunpack.c.h.b16 %v414
    %v486 = vunpack.c.l.b16 %v415
    %v487 = vunpack.c.h.b16 %v415
    %v488 = vunpack.c.l.b16 %v416
    %v489 = vunpack.c.h.b16 %v416
    %v490 = vunpack.c.l.b16 %v417
    %v491 = vunpack.c.h.b16 %v417
    %v492 = vunpack.c.l.b16 %v418
    %v493 = vunpack.c.h.b16 %v418
    %v494 = vunpack.c.l.b16 %v419
    %v495 = vunpack.c.h.b16 %v419
    %v496 = vunpack.c.l.b16 %v420
    %v497 = vunpack.c.h.b16 %v420
    %v498 = vunpack.c.l.b16 %v421
    %v499 = vunpack.c.h.b16 %v421
    %v500 = vunpack.c.l.b16 %v422
    %v501 = vunpack.c.h.b16 %v422
    %v502 = vunpack.c.l.b16 %v423
    %v503 = vunpack.c.h.b16 %v423
    %v504 = vunpack.c.l.b16 %v424
    %v505 = vunpack.c.h.b16 %v424
    %v506 = vunpack.c.l.b16 %v425
    %v507 = vunpack.c.h.b16 %v425
    %v508 = vunpack.c.l.b16 %v426
    %v509 = vunpack.c.h.b16 %v426
    %v510 = vunpack.c.l.b16 %v427
    %v511 = vunpack.c.h.b16 %v427
    %v512 = vunpack.c.l.b16 %v428
    %v513 = vunpack.c.h.b16 %v428
    %v514 = vunpack.c.l.b16 %v429
    %v515 = vunpack.c.h.b16 %v429
    %v516 = vunpack.c.l.b16 %v430
    %v517 = vunpack.c.h.b16 %v430
    %v518 = vunpack.c.l.b16 %v431
    %v519 = vunpack.c.h.b16 %v431
    %v520 = vunpack.c.l.b16 %v432
    %v521 = vunpack.c.h.b16 %v432
    %v522 = vunpack.c.l.b16 %v433
    %v523 = vunpack.c.h.b16 %v433
    %v524 = vunpack.c.l.b16 %v434
    %v525 = vunpack.c.h.b16 %v434
    %v526 = vunpack.c.l.b16 %v435
    %v527 = vunpack.c.h.b16 %v435
    %v528 = vunpack.c.l.b16 %v436
    %v529 = vunpack.c.h.b16 %v436
    %v530 = vunpack.c.l.b16 %v437
    %v531 = vunpack.c.h.b16 %v437
    %v532 = vunpack.c.l.b16 %v438
    %v533 = vunpack.c.h.b16 %v438
    %v534 = vunpack.c.l.b16 %v439
    %v535 = vunpack.c.h.b16 %v439
    %v536 = vpack.c.b16 %v474, %v472
    %v537 = vpack.c.b16 %v475, %v473
    %v538 = vpack.c.b16 %v478, %v476
    %v539 = vpack.c.b16 %v479, %v477
    %v540 = vpack.c.b16 %v482, %v480
    %v541 = vpack.c.b16 %v483, %v481
    %v542 = vpack.c.b16 %v486, %v484
    %v543 = vpack.c.b16 %v487, %v485
    %v544 = vpack.c.b16 %v490, %v488
    %v545 = vpack.c.b16 %v491, %v489
    %v546 = vpack.c.b16 %v494, %v492
    %v547 = vpack.c.b16 %v495, %v493
    %v548 = vpack.c.b16 %v498, %v496
    %v549 = vpack.c.b16 %v499, %v497
    %v550 = vpack.c.b16 %v502, %v500
    %v551 = vpack.c.b16 %v503, %v501
    %v552 = vpack.c.b16 %v506, %v504
    %v553 = vpack.c.b16 %v507, %v505
    %v554 = vpack.c.b16 %v510, %v508
    %v555 = vpack.c.b16 %v511, %v509
    %v556 = vpack.c.b16 %v514, %v512
    %v557 = vpack.c.b16 %v515, %v513
    %v558 = vpack.c.b16 %v518, %v516
    %v559 = vpack.c.b16 %v519, %v517
    %v560 = vpack.c.b16 %v522, %v520
    %v561 = vpack.c.b16 %v523, %v521
    %v562 = vpack.c.b16 %v526, %v524
    %v563 = vpack.c.b16 %v527, %v525
    %v564 = vpack.c.b16 %v530, %v528
    %v565 = vpack.c.b16 %v531, %v529
    %v566 = vpack.c.b16 %v534, %v532
    %v567 = vpack.c.b16 %v535, %v533
    %600 = vmatprep.subr.bf16.mxu0 %v551
    %601 = vmatpush1.bf16.msra.mxu0 %v550
    %602 = vmatprep.subr.bf16.mxu0 %v549
    %603 = vmatpush1.bf16.msra.mxu0 %v548
    %604 = vmatprep.subr.bf16.mxu0 %v547
    %605 = vmatpush1.bf16.msra.mxu0 %v546
    %606 = vmatprep.subr.bf16.mxu0 %v545
    %607 = vmatpush1.bf16.msra.mxu0 %v544
    %608 = vmatprep.subr.bf16.mxu0 %v543
    %609 = vmatpush1.bf16.msra.mxu0 %v542
    %610 = vmatprep.subr.bf16.mxu0 %v541
    %611 = vmatpush1.bf16.msra.mxu0 %v540
    %612 = vmatprep.subr.bf16.mxu0 %v539
    %613 = vmatpush1.bf16.msra.mxu0 %v538
    %614 = vmatprep.subr.bf16.mxu0 %v537
    %615 = vmatpush1.bf16.msra.mxu0 %v536
    %616 = vmatprep.subr.bf16.mxu0 %v567
    %617 = vmatpush2.bf16.msra.mxu0 %v566
    %618 = vmatprep.subr.bf16.mxu0 %v565
    %619 = vmatpush2.bf16.msra.mxu0 %v564
    %620 = vmatprep.subr.bf16.mxu0 %v563
    %621 = vmatpush2.bf16.msra.mxu0 %v562
    %622 = vmatprep.subr.bf16.mxu0 %v561
    %623 = vmatpush2.bf16.msra.mxu0 %v560
    %624 = vmatprep.subr.bf16.mxu0 %v559
    %625 = vmatpush2.bf16.msra.mxu0 %v558
    %626 = vmatprep.subr.bf16.mxu0 %v557
    %627 = vmatpush2.bf16.msra.mxu0 %v556
    %628 = vmatprep.subr.bf16.mxu0 %v555
    %629 = vmatpush2.bf16.msra.mxu0 %v554
    %630 = vmatprep.subr.bf16.mxu0 %v553
    %631 = vmatpush2.bf16.msra.mxu0 %v552
    %632 = vmatprep.mubr.bf16.mxu0 %v95
    %633 = vmatmul.mubr.bf16.gmra.mxu0 %v94
    %v634 = vpop.f32.mrf.mxu0
    %v635 = vadd.f32 0.0, %v634
    %v636 = vpop.f32.mrf.mxu0
    %v637 = vadd.f32 0.0, %v636
    %v638 = vpop.f32.mrf.mxu0
    %v639 = vadd.f32 0.0, %v638
    %v640 = vpop.f32.mrf.mxu0
    %v641 = vadd.f32 0.0, %v640
    %642 = vmatprep.mubr.bf16.mxu0 %v97
    %643 = vmatmul.mubr.bf16.gmra.mxu0 %v96
    %v644 = vpop.f32.mrf.mxu0
    %v645 = vadd.f32 0.0, %v644
    %v646 = vpop.f32.mrf.mxu0
    %v647 = vadd.f32 0.0, %v646
    %v648 = vpop.f32.mrf.mxu0
    %v649 = vpop.f32.mrf.mxu0
    %650 = vdwg.mxu0
    %v651 = vadd.f32 %v392, %v635
    %v652 = vadd.f32 %v394, %v637
    %v653 = vadd.f32 %v396, %v639
    %v654 = vadd.f32 %v398, %v641
    %v655 = vadd.f32 %v402, %v645
    %v656 = vadd.f32 %v404, %v647
    %v657 = vld [vmem:[#allocation2] sm:$0xff]
    %v658 = vld [vmem:[#allocation2 + $0x8] sm:$0xff]
    %v659 = vld [vmem:[#allocation2 + $0x10] sm:$0xff]
    %v660 = vld [vmem:[#allocation12] ss:$8 sm:$0x3]
    %662 = vset.pattern.permute.xlu0 0
    %663 = vperm.xlu0 %662, %v657
    %v664 = vpop.permute.xlu0 %663
    %667 = vset.pattern.permute.xlu0 0
    %668 = vperm.xlu0 %667, %v658
    %v669 = vpop.permute.xlu0 %668
    %672 = vset.pattern.permute.xlu0 0
    %673 = vperm.xlu0 %672, %v659
    %v674 = vpop.permute.xlu0 %673
    %v677 = vlaneseq
    %v678 = vshrl.u32 %v677, 7
    %v679 = vsub.s32 0, %v678
    %v680 = vrot.slane %v660, %v679
    %v681 = vlaneseq
    %v682 = vshrl.u32 %v681, 7
    %v683 = vsub.s32 1, %v682
    %v684 = vrot.slane %v660, %v683
    %v687 = vmul.f32 %v664, %v680
    %v688 = vmul.f32 %v664, %v684
    %v689 = vmul.f32 %v669, %v680
    %v690 = vmul.f32 %v669, %v684
    %v691 = vmul.f32 %v674, %v680
    %v692 = vmul.f32 %v674, %v684
    %v693 = vadd.f32 %v651, %v687
    %v694 = vadd.f32 %v652, %v688
    %v695 = vadd.f32 %v653, %v689
    %v696 = vadd.f32 %v654, %v690
    %v697 = vadd.f32 %v655, %v691
    %v698 = vadd.f32 %v656, %v692
    %v699 = vld [vmem:[#allocation3] sm:$0xff]
    %v700 = vld [vmem:[#allocation3 + $0x8] sm:$0xff]
    %v701 = vld [vmem:[#allocation3 + $0x10] sm:$0xff]
    %s702 = scalar_lea.vmem [#allocation12], 1
    %v703 = vld [vmem:[%s702] ss:$8 sm:$0x3]
    %705 = vset.pattern.permute.xlu0 0
    %706 = vperm.xlu0 %705, %v699
    %v707 = vpop.permute.xlu0 %706
    %710 = vset.pattern.permute.xlu0 0
    %711 = vperm.xlu0 %710, %v700
    %v712 = vpop.permute.xlu0 %711
    %715 = vset.pattern.permute.xlu0 0
    %716 = vperm.xlu0 %715, %v701
    %v717 = vpop.permute.xlu0 %716
    %v720 = vlaneseq
    %v721 = vshrl.u32 %v720, 7
    %v722 = vsub.s32 0, %v721
    %v723 = vrot.slane %v703, %v722
    %v724 = vlaneseq
    %v725 = vshrl.u32 %v724, 7
    %v726 = vsub.s32 1, %v725
    %v727 = vrot.slane %v703, %v726
    %v730 = vmul.f32 %v707, %v723
    %v731 = vmul.f32 %v707, %v727
    %v732 = vmul.f32 %v712, %v723
    %v733 = vmul.f32 %v712, %v727
    %v734 = vmul.f32 %v717, %v723
    %v735 = vmul.f32 %v717, %v727
    %v736 = vadd.f32 %v693, %v730
    %v737 = vadd.f32 %v694, %v731
    %v738 = vadd.f32 %v695, %v732
    %v739 = vadd.f32 %v696, %v733
    %v740 = vadd.f32 %v697, %v734
    %v741 = vadd.f32 %v698, %v735
    %v742 = vld [vmem:[#allocation4] sm:$0xff]
    %v743 = vld [vmem:[#allocation4 + $0x8] sm:$0xff]
    %v744 = vld [vmem:[#allocation4 + $0x10] sm:$0xff]
    %s745 = scalar_lea.vmem [#allocation12], 2
    %v746 = vld [vmem:[%s745] ss:$8 sm:$0x3]
    %748 = vset.pattern.permute.xlu0 0
    %749 = vperm.xlu0 %748, %v742
    %v750 = vpop.permute.xlu0 %749
    %753 = vset.pattern.permute.xlu0 0
    %754 = vperm.xlu0 %753, %v743
    %v755 = vpop.permute.xlu0 %754
    %758 = vset.pattern.permute.xlu0 0
    %759 = vperm.xlu0 %758, %v744
    %v760 = vpop.permute.xlu0 %759
    %v763 = vlaneseq
    %v764 = vshrl.u32 %v763, 7
    %v765 = vsub.s32 0, %v764
    %v766 = vrot.slane %v746, %v765
    %v767 = vlaneseq
    %v768 = vshrl.u32 %v767, 7
    %v769 = vsub.s32 1, %v768
    %v770 = vrot.slane %v746, %v769
    %v773 = vmul.f32 %v750, %v766
    %v774 = vmul.f32 %v750, %v770
    %v775 = vmul.f32 %v755, %v766
    %v776 = vmul.f32 %v755, %v770
    %v777 = vmul.f32 %v760, %v766
    %v778 = vmul.f32 %v760, %v770
    %v779 = vadd.f32 %v736, %v773
    %v780 = vadd.f32 %v737, %v774
    %v781 = vadd.f32 %v738, %v775
    %v782 = vadd.f32 %v739, %v776
    %v783 = vadd.f32 %v740, %v777
    %v784 = vadd.f32 %v741, %v778
    %v785 = vld [vmem:[#allocation5] sm:$0xff]
    %v786 = vld [vmem:[#allocation5 + $0x8] sm:$0xff]
    %v787 = vld [vmem:[#allocation5 + $0x10] sm:$0xff]
    %s788 = scalar_lea.vmem [#allocation12], 3
    %v789 = vld [vmem:[%s788] ss:$8 sm:$0x3]
    %791 = vset.pattern.permute.xlu0 0
    %792 = vperm.xlu0 %791, %v785
    %v793 = vpop.permute.xlu0 %792
    %796 = vset.pattern.permute.xlu0 0
    %797 = vperm.xlu0 %796, %v786
    %v798 = vpop.permute.xlu0 %797
    %801 = vset.pattern.permute.xlu0 0
    %802 = vperm.xlu0 %801, %v787
    %v803 = vpop.permute.xlu0 %802
    %v806 = vlaneseq
    %v807 = vshrl.u32 %v806, 7
    %v808 = vsub.s32 0, %v807
    %v809 = vrot.slane %v789, %v808
    %v810 = vlaneseq
    %v811 = vshrl.u32 %v810, 7
    %v812 = vsub.s32 1, %v811
    %v813 = vrot.slane %v789, %v812
    %v816 = vmul.f32 %v793, %v809
    %v817 = vmul.f32 %v793, %v813
    %v818 = vmul.f32 %v798, %v809
    %v819 = vmul.f32 %v798, %v813
    %v820 = vmul.f32 %v803, %v809
    %v821 = vmul.f32 %v803, %v813
    %v822 = vadd.f32 %v779, %v816
    %v823 = vadd.f32 %v780, %v817
    %v824 = vadd.f32 %v781, %v818
    %v825 = vadd.f32 %v782, %v819
    %v826 = vadd.f32 %v783, %v820
    %v827 = vadd.f32 %v784, %v821
    %831 = vrot.lane.b32.xlu0 %v89, 1
    %v832 = vpop.permute.xlu0 %831
    %833 = vrot.lane.b32.xlu0 %v91, 1
    %v834 = vpop.permute.xlu0 %833
    %835 = vrot.lane.b32.xlu0 %v93, 1
    %v836 = vpop.permute.xlu0 %835
    %vm840 = vcmask 7168
    %841 = vst.msk [vmem:[#allocation2] sm:$0xff] %vm840, %v832
    %842 = vst.msk [vmem:[#allocation2 + $0x8] sm:$0xff] %vm840, %v834
    %843 = vst.msk [vmem:[#allocation2 + $0x10] sm:$0xff] %vm840, %v836
    %844 = vrot.lane.b32.xlu0 %v89, 2
    %v845 = vpop.permute.xlu0 %844
    %846 = vrot.lane.b32.xlu0 %v91, 2
    %v847 = vpop.permute.xlu0 %846
    %848 = vrot.lane.b32.xlu0 %v93, 2
    %v849 = vpop.permute.xlu0 %848
    %853 = vst.msk [vmem:[#allocation3] sm:$0xff] %vm840, %v845
    %854 = vst.msk [vmem:[#allocation3 + $0x8] sm:$0xff] %vm840, %v847
    %855 = vst.msk [vmem:[#allocation3 + $0x10] sm:$0xff] %vm840, %v849
    %859 = vrot.lane.b32.xlu0 %v823, 1
    %v860 = vpop.permute.xlu0 %859
    %861 = vrot.lane.b32.xlu0 %v825, 1
    %v862 = vpop.permute.xlu0 %861
    %863 = vrot.lane.b32.xlu0 %v827, 1
    %v864 = vpop.permute.xlu0 %863
    %868 = vst.msk [vmem:[#allocation4] sm:$0xff] %vm840, %v860
    %869 = vst.msk [vmem:[#allocation4 + $0x8] sm:$0xff] %vm840, %v862
    %870 = vst.msk [vmem:[#allocation4 + $0x10] sm:$0xff] %vm840, %v864
    %871 = vrot.lane.b32.xlu0 %v823, 2
    %v872 = vpop.permute.xlu0 %871
    %873 = vrot.lane.b32.xlu0 %v825, 2
    %v874 = vpop.permute.xlu0 %873
    %875 = vrot.lane.b32.xlu0 %v827, 2
    %v876 = vpop.permute.xlu0 %875
    %880 = vst.msk [vmem:[#allocation5] sm:$0xff] %vm840, %v872
    %881 = vst.msk [vmem:[#allocation5 + $0x8] sm:$0xff] %vm840, %v874
    %882 = vst.msk [vmem:[#allocation5 + $0x10] sm:$0xff] %vm840, %v876
    %v883 = vmax.f32 %v822, -1.0
    %v884 = vmax.f32 %v823, -1.0
    %v885 = vmax.f32 %v824, -1.0
    %v886 = vmax.f32 %v825, -1.0
    %v887 = vmax.f32 %v826, -1.0
    %v888 = vmax.f32 %v827, -1.0
    %v889 = vmin.f32 %v883, 1.0
    %v890 = vmin.f32 %v884, 1.0
    %v891 = vmin.f32 %v885, 1.0
    %v892 = vmin.f32 %v886, 1.0
    %v893 = vmin.f32 %v887, 1.0
    %v894 = vmin.f32 %v888, 1.0
    %895 = vst [vmem:[#allocation14] sm:$0xff] %v889
    %896 = vst [vmem:[#allocation14 + $0x8] sm:$0xff] %v890
    %897 = vst [vmem:[#allocation14 + $0x10] sm:$0xff] %v891
    %898 = vst [vmem:[#allocation14 + $0x18] sm:$0xff] %v892
    %899 = vst [vmem:[#allocation14 + $0x20] sm:$0xff] %v893
    %900 = vst [vmem:[#allocation14 + $0x28] sm:$0xff] %v894
    // Predicated region
    $region38: #{tpu_custom_call.1} parent=1 // pred_check
      _
    $region39: #{tpu_custom_call.1} parent=1 // pred_check_branch
      %902 = sbr.rel (0) target = $region41
    $region40: #{tpu_custom_call.1} parent=1 // pred_region
      %s904 = ssub.s32 768, 768
      %905 = vsyncadd [#allocation8], %s904
      %s906 = sshll.u32 [#allocation14], 4
      %s907 = int_to_ptr.vmem [resolvable:$true] %s906
      %912 = dma.vmem_to_hbm [thread:$0]  %s907, 768, %s4, [#allocation8], 256, 256, 16
    $region41: #{tpu_custom_call.1} parent=1 // pred_fallthru
      _
    // Predicated region
    $region42: #{tpu_custom_call.1} parent=1 // pred_check
      _
    $region43: #{tpu_custom_call.1} parent=1 // pred_check_branch
      %914 = sbr.rel (0) target = $region45
    $region44: #{tpu_custom_call.1} parent=1 // pred_region
      %915 = dma.done [#allocation8], 768
    $region45: #{tpu_custom_call.1} parent=1 // pred_fallthru
      _
    %916 = vsyncpa [#allocation7], 1
    %917 = vsyncpa [#allocation10], 1
    %918 = vsyncpa [#allocation13], 1
    %919 = vsyncpa [#allocation8], 1

</llo_original>
